<compile_context>
chip_gen: v5e
topology: v5e:2x2
jax: 0.10.0
libtpu: 0.0.40
codegen_flags: <defaults>
</compile_context>

<pallas_src>
import jax
import jax.numpy as jnp
from jax.experimental import pallas as pl
from jax.experimental.pallas import tpu as pltpu


_TILE_P_CAP = 128 * 1024          # max lanes per block (~5.8 MB HBM traffic / step)
_VMEM_LIMIT = 48 * 1024 * 1024    # explicit scoped-VMEM limit (safe on v5e/v6e/v7x)


def _round_up(x, m):
    return ((x + m - 1) // m) * m


def _cdiv(a, b):
    return -(-a // b)


def _conv1x1_residual_relu_kernel(x_ref, w_ref, b_ref, o_ref):
    # x_ref: (Cin, TP)   padded-image pixels; channels on sublanes, pixels on lanes
    # w_ref: (Cout, Cin) residual-folded weights
    # b_ref: (Cout, 1)   bias
    # o_ref: (Cout, TP)  final output block (TP multiple of 128 -> unmasked stores)
    x = x_ref[...]
    w = w_ref[...]
    cin = x_ref.shape[0]
    # Cin broadcast multiply-adds on the VPU; bias folded into the init term.
    y = b_ref[...] + w[:, 0:1] * x[0:1, :]
    for c in range(1, cin):
        y = y + w[:, c:c + 1] * x[c:c + 1, :]
    o_ref[...] = jnp.maximum(y, 0.0).astype(o_ref.dtype)


def _choose_tile_p(P, N):
    if P <= 128:
        return P                          # single block equal to the full pixel axis
    max_tile = (P // 128) * 128           # largest 128-multiple not exceeding P
    min_blocks = 2 if N == 1 else 1       # >=2 grid steps so v7x's 2 TCs both work
    t = _round_up(_cdiv(P, min_blocks), 128)
    return max(128, min(t, _TILE_P_CAP, max_tile))


def model_forward(x, w, b, *, tile_p=None):
    """x: (N, Cin, H, W) f32; w: (Cout, Cin, 1, 1); b: (Cout,). Returns (N, Cout, H+2, W+2)."""
    N, Cin, H, W = x.shape
    Cout = w.shape[0]
    assert Cout >= Cin, "residual folding assumes Cout >= Cin"
    Hp, Wp = H + 2, W + 2
    P = Hp * Wp

    if tile_p is None:
        tile_p = _choose_tile_p(P, N)
    elif P > 128:
        tile_p = max(128, min(_round_up(tile_p, 128), _TILE_P_CAP, (P // 128) * 128))
    else:
        tile_p = P
    grid = (N, _cdiv(P, tile_p))

    # Spatial zero-pad of the (cheap, 3-channel) input; after this the whole op is
    # pointwise per padded pixel, so the kernel produces the final layout directly.
    xp = jnp.pad(x.astype(jnp.float32), ((0, 0), (0, 0), (1, 1), (1, 1)))
    xp = xp.reshape(N, Cin, P)            # free: contiguous NCHW reshape

    # Fold the channel-zero-padded residual into the weights:
    #   relu(W xp + b + I_pad xp) == relu((W + I_pad) xp + b).
    w2 = w.reshape(Cout, Cin).astype(jnp.float32)
    w_eff = w2 + jnp.pad(jnp.eye(Cin, dtype=jnp.float32), ((0, Cout - Cin), (0, 0)))
    b2 = b.reshape(Cout, 1).astype(jnp.float32)

    out_flat = pl.pallas_call(
        _conv1x1_residual_relu_kernel,
        out_shape=jax.ShapeDtypeStruct((N, Cout, P), jnp.float32),
        grid=grid,
        in_specs=[
            pl.BlockSpec((None, Cin, tile_p), lambda n, i: (n, 0, i)),
            pl.BlockSpec((Cout, Cin), lambda n, i: (0, 0)),
            pl.BlockSpec((Cout, 1), lambda n, i: (0, 0)),
        ],
        out_specs=pl.BlockSpec((None, Cout, tile_p), lambda n, i: (n, 0, i)),
        compiler_params=pltpu.CompilerParams(
            dimension_semantics=("parallel", "parallel"),
            vmem_limit_bytes=_VMEM_LIMIT),
    )(xp, w_eff, b2)

    return out_flat.reshape(N, Cout, Hp, Wp)   # free reshape back to NCHW


def _reference(x, w, b):
    """Pure-JAX reference with the same interpretation of the residual."""
    N, Cin, H, W = x.shape
    Cout = w.shape[0]
    xp = jnp.pad(x, ((0, 0), (0, 0), (1, 1), (1, 1)))
    v1 = jnp.einsum("nchw,oc->nohw", xp, w.reshape(Cout, Cin)) + b[None, :, None, None]
    res = jnp.pad(xp, ((0, 0), (0, Cout - Cin), (0, 0), (0, 0)))
    return jnp.maximum(v1 + res, 0.0)


if __name__ == "__main__":
    key = jax.random.PRNGKey(0)
    kx, kw, kb = jax.random.split(key, 3)

    # Small shapes consistent with the module: Conv2d(3 -> 8, kernel 1, pad 1).
    N, Cin, H, W, Cout = 2, 3, 16, 16, 8
    x = jax.random.normal(kx, (N, Cin, H, W), dtype=jnp.float32)
    w = jax.random.normal(kw, (Cout, Cin, 1, 1), dtype=jnp.float32) * 0.1
    b = jax.random.normal(kb, (Cout,), dtype=jnp.float32) * 0.1

    fwd = jax.jit(model_forward)
    out = jax.block_until_ready(fwd(x, w, b))
    ref = _reference(x, w, b)

    assert out.shape == (N, Cout, H + 2, W + 2), out.shape
    assert jnp.allclose(out, ref, atol=1e-5, rtol=1e-5), "mismatch vs reference"
    print("KERNEL_OK")
</pallas_src>

<mosaic_0001>
module attributes {stable_mosaic.version = 11 : i64} {
  func.func @_conv1x1_residual_relu_kernel(%arg0: i32, %arg1: i32, %arg2: memref<1x3x256xf32, #tpu.memory_space<vmem>>, %arg3: memref<8x3xf32, #tpu.memory_space<vmem>>, %arg4: memref<8x1xf32, #tpu.memory_space<vmem>>, %arg5: memref<1x8x256xf32, #tpu.memory_space<vmem>>) attributes {dimension_semantics = [#tpu.dimension_semantics<parallel>, #tpu.dimension_semantics<parallel>], iteration_bounds = array<i64: 2, 2>, scalar_prefetch = 0 : i64, scratch_operands = 0 : i64, tpu.core_type = #tpu.core_type<tc>, window_params = [{transform_indices = @transform_0, window_bounds = array<i64: 1, 3, 256>}, {pipeline_mode = #tpu.pipeline_mode<synchronous>, transform_indices = @transform_1, window_bounds = array<i64: 8, 3>}, {pipeline_mode = #tpu.pipeline_mode<synchronous>, transform_indices = @transform_2, window_bounds = array<i64: 8, 1>}, {transform_indices = @transform_3, window_bounds = array<i64: 1, 8, 256>}]} {
    %c0 = arith.constant 0 : index
    %c0_0 = arith.constant 0 : index
    %c0_1 = arith.constant 0 : index
    %0 = vector.load %arg2[%c0, %c0_0, %c0_1] : memref<1x3x256xf32, #tpu.memory_space<vmem>>, vector<1x3x256xf32>
    %1 = vector.shape_cast %0 : vector<1x3x256xf32> to vector<3x256xf32>
    %c0_2 = arith.constant 0 : index
    %c0_3 = arith.constant 0 : index
    %2 = vector.load %arg3[%c0_2, %c0_3] : memref<8x3xf32, #tpu.memory_space<vmem>>, vector<8x3xf32>
    %c0_4 = arith.constant 0 : index
    %c0_5 = arith.constant 0 : index
    %3 = vector.load %arg4[%c0_4, %c0_5] : memref<8x1xf32, #tpu.memory_space<vmem>>, vector<8x1xf32>
    %4 = vector.extract_strided_slice %2 {offsets = [0, 0], sizes = [8, 1], strides = [1, 1]} : vector<8x3xf32> to vector<8x1xf32>
    %5 = vector.extract_strided_slice %1 {offsets = [0, 0], sizes = [1, 256], strides = [1, 1]} : vector<3x256xf32> to vector<1x256xf32>
    %6 = vector.broadcast %4 : vector<8x1xf32> to vector<8x256xf32>
    %7 = vector.broadcast %5 : vector<1x256xf32> to vector<8x256xf32>
    %8 = arith.mulf %6, %7 : vector<8x256xf32>
    %9 = vector.broadcast %3 : vector<8x1xf32> to vector<8x256xf32>
    %10 = arith.addf %9, %8 : vector<8x256xf32>
    %11 = vector.extract_strided_slice %2 {offsets = [0, 1], sizes = [8, 1], strides = [1, 1]} : vector<8x3xf32> to vector<8x1xf32>
    %12 = vector.extract_strided_slice %1 {offsets = [1, 0], sizes = [1, 256], strides = [1, 1]} : vector<3x256xf32> to vector<1x256xf32>
    %13 = vector.broadcast %11 : vector<8x1xf32> to vector<8x256xf32>
    %14 = vector.broadcast %12 : vector<1x256xf32> to vector<8x256xf32>
    %15 = arith.mulf %13, %14 : vector<8x256xf32>
    %16 = arith.addf %10, %15 : vector<8x256xf32>
    %17 = vector.extract_strided_slice %2 {offsets = [0, 2], sizes = [8, 1], strides = [1, 1]} : vector<8x3xf32> to vector<8x1xf32>
    %18 = vector.extract_strided_slice %1 {offsets = [2, 0], sizes = [1, 256], strides = [1, 1]} : vector<3x256xf32> to vector<1x256xf32>
    %19 = vector.broadcast %17 : vector<8x1xf32> to vector<8x256xf32>
    %20 = vector.broadcast %18 : vector<1x256xf32> to vector<8x256xf32>
    %21 = arith.mulf %19, %20 : vector<8x256xf32>
    %22 = arith.addf %16, %21 : vector<8x256xf32>
    %cst = arith.constant 0.000000e+00 : f32
    %23 = vector.broadcast %cst : f32 to vector<8x256xf32>
    %24 = arith.maximumf %22, %23 : vector<8x256xf32>
    %c0_6 = arith.constant 0 : index
    %c0_7 = arith.constant 0 : index
    %c0_8 = arith.constant 0 : index
    %25 = vector.load %arg5[%c0_6, %c0_7, %c0_8] : memref<1x8x256xf32, #tpu.memory_space<vmem>>, vector<1x8x256xf32>
    %26 = vector.shape_cast %25 : vector<1x8x256xf32> to vector<8x256xf32>
    %27 = vector.shape_cast %24 : vector<8x256xf32> to vector<1x8x256xf32>
    tpu.vector_store %arg5[%c0_6, %c0_7, %c0_8], %27 {strides = array<i32>} : memref<1x8x256xf32, #tpu.memory_space<vmem>>, vector<1x8x256xf32>,
    return
  }
  func.func @transform_0(%arg0: i32, %arg1: i32) -> (i32, i32, i32) {
    %c0_i32 = arith.constant 0 : i32
    %c0_i32_0 = arith.constant 0 : i32
    return %arg0, %c0_i32, %arg1 : i32, i32, i32
  }
  func.func @transform_1(%arg0: i32, %arg1: i32) -> (i32, i32) {
    %c0_i32 = arith.constant 0 : i32
    %c0_i32_0 = arith.constant 0 : i32
    %c0_i32_1 = arith.constant 0 : i32
    return %c0_i32, %c0_i32_0 : i32, i32
  }
  func.func @transform_2(%arg0: i32, %arg1: i32) -> (i32, i32) {
    %c0_i32 = arith.constant 0 : i32
    %c0_i32_0 = arith.constant 0 : i32
    %c0_i32_1 = arith.constant 0 : i32
    return %c0_i32, %c0_i32_0 : i32, i32
  }
  func.func @transform_3(%arg0: i32, %arg1: i32) -> (i32, i32, i32) {
    %c0_i32 = arith.constant 0 : i32
    %c0_i32_0 = arith.constant 0 : i32
    return %arg0, %c0_i32, %arg1 : i32, i32, i32
  }
}

</mosaic_0001>

<llo_original>
// kernel: model_forward.1
$region0: #{model_forward.1}
  #allocation0 [shape = 'u32[]', space=smem, size = 0x4, offset = 0x4, fixed_abs, tag = 'smem constant byte address 0x4 - core index']
  #allocation1 [shape = 'u32[72,128]{1,0:T(1,128)}', space=vmem, size = 0x9000, scoped, tag = 'internal scratch']
  %s0 = inlined_call_operand.vmem [shape: f32[2,3,324], index: 0, kind: input, shape index: {}]
  %s1 = inlined_call_operand.vmem [shape: f32[8,3], index: 1, kind: input, shape index: {}]
  %s2 = inlined_call_operand.vmem [shape: f32[8,1], index: 2, kind: input, shape index: {}]
  %s3 = inlined_call_operand.vmem [shape: f32[2,8,324], index: 3, kind: output, shape index: {}]
  %s4 = sld [smem:[#allocation0]]
  $region107: #{model_forward.1} parent=0
    _
  %s6 = ssub.s32 1, %s4
  %s7 = scalar_select 0, %s6, %s4
  $region1: #{model_forward.1} parent=0
    #allocation2 [shape = 'u8[16384]{0}', space=vmem, size = 0x4000, scoped, tag = 'output window, operand 0']
    loop: start=0, step=1, limit=6
    $region2: #{model_forward.1} parent=1 // loop_pre_header
      _
    $region3: #{model_forward.1} parent=1 // loop_header
      %s9 = sphi 0, %s13
      %p10 = scmp.ge.s32.totalorder %s9, 6
      %s16 = sphi 0, %s28
      %s17 = sphi 0, %s24
      %s18 = sphi 0, %s16
      %s19 = sphi 0, %s17
      %s20 = sphi 0, %s18
      %s21 = sphi 0, %s19
      %s33 = sphi 0, %s35
      %s36 = sphi 0, %s33
      %s37 = sphi 0, %s36
      %s53 = sphi 0, %s37
      %s57 = sphi 0, %s57
      %s59 = sphi 0, %s57
      %s60 = sphi 0, %s59
      %s74 = sphi 0, %s60
      %s78 = sphi 0, %s78
      %s80 = sphi 0, %s78
      %s81 = sphi 0, %s80
      %s95 = sphi 0, %s81
      %s103 = sphi 0, %s105
      %s106 = sphi 0, %s103
      %s107 = sphi 0, %s106
      %s123 = sphi 0, %s107
    $region4: #{model_forward.1} parent=1 // loop_header_branch
      %12 = sbr.rel (%p10) target = $region8
    $region5: #{model_forward.1} parent=1 // loop_body
      %s14 = ssub.s32 %s9, 1
      %s15 = ssub.s32 %s9, 2
      %s22 = sadd.s32 1, %s17
      %p23 = scmp.ge.s32.totalorder %s22, 2
      %s24 = scalar_select %p23, 0, %s22
      %s25 = sadd.s32 1, %s16
      %s26 = scalar_select %p23, %s25, %s16
      %p27 = scmp.ge.s32.totalorder %s26, 2
      %s28 = scalar_select %p27, 0, %s26
      %s29 = ssub.s32 %s16, %s28
      %s30 = ssub.s32 %s17, %s24
      %s31 = sor.u32 %s29, %s30
      %p32 = scmp.eq.s32.totalorder %s31, 0
      %s34 = sadd.s32 %s33, 1
      %s35 = scalar_select %p32, %s33, %s34
      %p38 = pneg %p32
      %p39 = scmp.eq.s32.totalorder %s9, 3
      %p40 = por %p38, %p39
      %p41 = scmp.ne.s32.totalorder %s33, %s36
      %p42 = scmp.eq.s32.totalorder %s9, 0
      %p43 = por %p41, %p42
      %p44 = scmp.ne.s32.totalorder %s33, %s36
      %p45 = scmp.eq.s32.totalorder %s14, 3
      %p46 = por %p44, %p45
      %p47 = scmp.ne.s32.totalorder %s36, %s37
      %p48 = scmp.eq.s32.totalorder %s14, 0
      %p49 = por %p47, %p48
      %p50 = scmp.ne.s32.totalorder %s36, %s37
      %p51 = scmp.eq.s32.totalorder %s15, 3
      %p52 = por %p50, %p51
      %p54 = scmp.ne.s32.totalorder %s37, %s53
      %p55 = scmp.eq.s32.totalorder %s15, 0
      %p56 = por %p54, %p55
      %s58 = sadd.s32 %s57, 1
      %p61 = scmp.eq.s32.totalorder %s9, 3
      %p62 = scmp.ne.s32.totalorder %s57, %s59
      %p63 = scmp.eq.s32.totalorder %s9, 0
      %p64 = por %p62, %p63
      %p65 = scmp.ne.s32.totalorder %s57, %s59
      %p66 = scmp.eq.s32.totalorder %s14, 3
      %p67 = por %p65, %p66
      %p68 = scmp.ne.s32.totalorder %s59, %s60
      %p69 = scmp.eq.s32.totalorder %s14, 0
      %p70 = por %p68, %p69
      %p71 = scmp.ne.s32.totalorder %s59, %s60
      %p72 = scmp.eq.s32.totalorder %s15, 3
      %p73 = por %p71, %p72
      %p75 = scmp.ne.s32.totalorder %s60, %s74
      %p76 = scmp.eq.s32.totalorder %s15, 0
      %p77 = por %p75, %p76
      %s79 = sadd.s32 %s78, 1
      %p82 = scmp.eq.s32.totalorder %s9, 3
      %p83 = scmp.ne.s32.totalorder %s78, %s80
      %p84 = scmp.eq.s32.totalorder %s9, 0
      %p85 = por %p83, %p84
      %p86 = scmp.ne.s32.totalorder %s78, %s80
      %p87 = scmp.eq.s32.totalorder %s14, 3
      %p88 = por %p86, %p87
      %p89 = scmp.ne.s32.totalorder %s80, %s81
      %p90 = scmp.eq.s32.totalorder %s14, 0
      %p91 = por %p89, %p90
      %p92 = scmp.ne.s32.totalorder %s80, %s81
      %p93 = scmp.eq.s32.totalorder %s15, 3
      %p94 = por %p92, %p93
      %p96 = scmp.ne.s32.totalorder %s81, %s95
      %p97 = scmp.eq.s32.totalorder %s15, 0
      %p98 = por %p96, %p97
      %s99 = ssub.s32 %s16, %s28
      %s100 = ssub.s32 %s17, %s24
      %s101 = sor.u32 %s99, %s100
      %p102 = scmp.eq.s32.totalorder %s101, 0
      %s104 = sadd.s32 %s103, 1
      %s105 = scalar_select %p102, %s103, %s104
      %p108 = pneg %p102
      %p109 = scmp.eq.s32.totalorder %s9, 3
      %p110 = por %p108, %p109
      %p111 = scmp.ne.s32.totalorder %s103, %s106
      %p112 = scmp.eq.s32.totalorder %s9, 0
      %p113 = por %p111, %p112
      %p114 = scmp.ne.s32.totalorder %s103, %s106
      %p115 = scmp.eq.s32.totalorder %s14, 3
      %p116 = por %p114, %p115
      %p117 = scmp.ne.s32.totalorder %s106, %s107
      %p118 = scmp.eq.s32.totalorder %s14, 0
      %p119 = por %p117, %p118
      %p120 = scmp.ne.s32.totalorder %s106, %s107
      %p121 = scmp.eq.s32.totalorder %s15, 3
      %p122 = por %p120, %p121
      %p124 = scmp.ne.s32.totalorder %s107, %s123
      %p125 = scmp.eq.s32.totalorder %s15, 0
      %p126 = por %p124, %p125
      %p127 = scmp.le.s32.totalorder 1, %s9
      %p128 = scmp.lt.s32.totalorder %s9, 5
      %p129 = pnand %p127, %p128
      %p130 = pneg %p129
      // Predicated region
      $region9: #{model_forward.1} parent=5 // pred_check
        _
      $region10: #{model_forward.1} parent=5 // pred_check_branch
        %132 = sbr.rel (%p129) target = $region12
      $region11: #{model_forward.1} parent=5 // pred_region
        %s133 = ssub.s32 %s9, 1
        // Predicated region
        $region13: #{model_forward.1} parent=11 // pred_check
          %p134 = pneg %p70
        $region14: #{model_forward.1} parent=11 // pred_check_branch
          %136 = sbr.rel (%p134) target = $region16
        $region15: #{model_forward.1} parent=11 // pred_region
          _
        $region16: #{model_forward.1} parent=11 // pred_fallthru
          _
        // Predicated region
        $region17: #{model_forward.1} parent=11 // pred_check
          %p137 = pneg %p91
        $region18: #{model_forward.1} parent=11 // pred_check_branch
          %139 = sbr.rel (%p137) target = $region20
        $region19: #{model_forward.1} parent=11 // pred_region
          _
        $region20: #{model_forward.1} parent=11 // pred_fallthru
          _
      $region12: #{model_forward.1} parent=5 // pred_fallthru
        _
      %p140 = scmp.lt.s32.totalorder %s9, 4
      // Predicated region
      $region21: #{model_forward.1} parent=5 // pred_check
        %p141 = pneg %p140
      $region22: #{model_forward.1} parent=5 // pred_check_branch
        %143 = sbr.rel (%p141) target = $region24
      $region23: #{model_forward.1} parent=5 // pred_region
        // Predicated region
        $region25: #{model_forward.1} parent=23 // pred_check
          %p144 = pneg %p43
        $region26: #{model_forward.1} parent=23 // pred_check_branch
          %146 = sbr.rel (%p144) target = $region28
        $region27: #{model_forward.1} parent=23 // pred_region
          %s147 = smul.u32 2, %s17
          %s148 = ssub.s32 3, %s147
          %p149 = scmp.lt.s32.totalorder %s148, 2
          %s150 = scalar_select %p149, %s148, 2
          %s151 = smul.u32 4, %s150
          %p152 = scmp.lt.s32.totalorder %s16, 1
          %s153 = scalar_select %p152, %s16, 1
          %p154 = scmp.lt.s32.totalorder %s147, 2
          %s155 = scalar_select %p154, %s147, 2
          %s156 = smul.addr %s153, 3
          %s157 = sadd.s32 %s155, %s156
          %s158 = smul.addr %s157, 4
          %s159 = scalar_lea.vmem %s0, %s158
          %s160 = smul.u32 2, %s17
          %s161 = ssub.s32 3, %s160
          %p162 = scmp.lt.s32.totalorder %s161, 2
          %s163 = scalar_select %p162, %s161, 2
          %s164 = smul.u32 4, %s163
        $region28: #{model_forward.1} parent=23 // pred_fallthru
          _
      $region24: #{model_forward.1} parent=5 // pred_fallthru
        _
      %p165 = scmp.le.s32.totalorder 1, %s9
      %p166 = scmp.lt.s32.totalorder %s9, 5
      %p167 = pnand %p165, %p166
      %p168 = pneg %p167
      // Predicated region
      $region29: #{model_forward.1} parent=5 // pred_check
        _
      $region30: #{model_forward.1} parent=5 // pred_check_branch
        %170 = sbr.rel (%p167) target = $region32
      $region31: #{model_forward.1} parent=5 // pred_region
        %s171 = ssub.s32 %s9, 1
        %s172 = smul.u32 2, %s19
        %s173 = ssub.s32 3, %s172
        %p174 = scmp.lt.s32.totalorder %s173, 2
        %s175 = scalar_select %p174, %s173, 2
        %s176 = smul.u32 4, %s175
        %p177 = scmp.lt.s32.totalorder %s18, 1
        %s178 = scalar_select %p177, %s18, 1
        %p179 = scmp.lt.s32.totalorder %s172, 2
        %s180 = scalar_select %p179, %s172, 2
        %s181 = smul.addr %s178, 3
        %s182 = sadd.s32 %s180, %s181
        %s183 = smul.addr %s182, 4
        %s184 = scalar_lea.vmem %s0, %s183
        %p185 = pneg %p49
        %p186 = pneg %p46
        %p187 = pneg %p70
        %p188 = pneg %p67
        %p189 = pneg %p91
        %p190 = pneg %p88
        %p191 = pneg %p119
        %p192 = pneg %p116
        %s193 = sand.u32 %s106, 1
        %s194 = sand.u32 %s106, 1
        %s195 = smul.addr %s194, 16
        %s196 = scalar_lea.vmem [#allocation2], %s195
        %s197 = smul.u32 2, %s19
        %s198 = ssub.s32 3, %s197
        %p199 = scmp.lt.s32.totalorder %s198, 2
        %s200 = scalar_select %p199, %s198, 2
        %s201 = smul.u32 4, %s200
        %p202 = scmp.lt.s32.totalorder %s18, 1
        %s203 = scalar_select %p202, %s18, 1
        %p204 = scmp.lt.s32.totalorder %s197, 2
        %s205 = scalar_select %p204, %s197, 2
        %s206 = smul.addr %s203, 3
        %s207 = sadd.s32 %s205, %s206
        %s208 = smul.addr %s207, 4
        %s209 = scalar_lea.vmem %s0, %s208
        %s210 = smul.u32 2, %s19
        %s211 = ssub.s32 3, %s210
        %p212 = scmp.lt.s32.totalorder %s211, 2
        %s213 = scalar_select %p212, %s211, 2
        %s214 = smul.u32 4, %s213
        %s215 = smul.u32 2, %s19
        %s216 = ssub.s32 3, %s215
        %p217 = scmp.lt.s32.totalorder %s216, 2
        %s218 = scalar_select %p217, %s216, 2
        %s219 = smul.u32 8, %s218
        %v220 = vld [vmem:[%s209] sm:$0x77]
        %v221 = vld [vmem:[%s1] sm:$0xff]
        %v222 = vld [vmem:[%s2] sm:$0xff]
        %224 = vset.pattern.permute.xlu0 0
        %225 = vperm.xlu0 %224, %v221
        %v226 = vpop.permute.xlu0 %225
        %v229 = vperm.slane %v220, 0
        %v230 = vperm.slane %v220, 4
        %v233 = vperm.slane %v229, 0
        %v234 = vperm.slane %v230, 0
        %v235 = vmul.f32 %v226, %v233
        %v236 = vmul.f32 %v226, %v234
        %238 = vset.pattern.permute.xlu0 0
        %239 = vperm.xlu0 %238, %v222
        %v240 = vpop.permute.xlu0 %239
        %v242 = vadd.f32 %v240, %v235
        %v243 = vadd.f32 %v240, %v236
        %244 = vset.pattern.permute.xlu0 1
        %245 = vperm.xlu0 %244, %v221
        %v246 = vpop.permute.xlu0 %245
        %v248 = vperm.slane %v220, 1
        %v249 = vperm.slane %v220, 5
        %v252 = vperm.slane %v248, 1
        %v253 = vperm.slane %v249, 1
        %v254 = vmul.f32 %v246, %v252
        %v255 = vmul.f32 %v246, %v253
        %v256 = vadd.f32 %v242, %v254
        %v257 = vadd.f32 %v243, %v255
        %258 = vset.pattern.permute.xlu0 2
        %259 = vperm.xlu0 %258, %v221
        %v260 = vpop.permute.xlu0 %259
        %v262 = vperm.slane %v220, 2
        %v263 = vperm.slane %v220, 6
        %v266 = vperm.slane %v262, 2
        %v267 = vperm.slane %v263, 2
        %v268 = vmul.f32 %v260, %v266
        %v269 = vmul.f32 %v260, %v267
        %v270 = vadd.f32 %v256, %v268
        %v271 = vadd.f32 %v257, %v269
        %v272 = vmax.f32 %v270, 0.0
        %v273 = vmax.f32 %v271, 0.0
        %274 = vst [vmem:[%s196] sm:$0xff] %v272
        %275 = vst [vmem:[%s196 + $0x8] sm:$0xff] %v273
        %s276 = sand.u32 %s106, 1
        %s277 = sand.u32 %s106, 1
        %s278 = smul.addr %s277, 16
        %s279 = scalar_lea.vmem [#allocation2], %s278
        // Predicated region
        $region33: #{model_forward.1} parent=31 // pred_check
          %p280 = pneg %p116
        $region34: #{model_forward.1} parent=31 // pred_check_branch
          %282 = sbr.rel (%p280) target = $region36
        $region35: #{model_forward.1} parent=31 // pred_region
          %s283 = smul.u32 2, %s19
          %s284 = ssub.s32 3, %s283
          %p285 = scmp.lt.s32.totalorder %s284, 2
          %s286 = scalar_select %p285, %s284, 2
          %s287 = smul.u32 8, %s286
          %p288 = scmp.ne.s32.totalorder 0, %s287
          %s289 = smul.addr %s18, 3
          %s290 = sadd.s32 %s283, %s289
          %s291 = smul.addr %s290, 8
          %s292 = scalar_lea.vmem %s3, %s291
          %s293 = smul.u32 %s286, 8
          // Predicated region
          $region37: #{model_forward.1} parent=35 // pred_check
            %p294 = pneg %p288
          $region38: #{model_forward.1} parent=35 // pred_check_branch
            %296 = sbr.rel (%p294) target = $region40
          $region39: #{model_forward.1} parent=35 // pred_region
            %p297 = scmp.lt.u32.totalorder %s293, 8
            %p298 = pneg %p297
            // Predicated region
            $region41: #{model_forward.1} parent=39 // pred_check
              _
            $region42: #{model_forward.1} parent=39 // pred_check_branch
              %300 = sbr.rel (%p297) target = $region44
            $region43: #{model_forward.1} parent=39 // pred_region
              %s316 = sand.u32 %s293, 7
              %p317 = scmp.eq.s32.totalorder %s316, 0
              // Predicated region
              $region56: #{model_forward.1} parent=43 // pred_check
                %p318 = pneg %p317
              $region57: #{model_forward.1} parent=43 // pred_check_branch
                %320 = sbr.rel (%p318) target = $region59
              $region58: #{model_forward.1} parent=43 // pred_region
                %s321 = sshrl.u32 %s293, 3
                %s322 = sshrl.u32 %s321, 5
                // While loop
                $region60: #{model_forward.1} parent=58 // loop_pre_header
                  _
                $region61: #{model_forward.1} parent=58 // loop_header
                  %s324 = sphi 0, %s326
                  %p325 = scmp.ge.s32.totalorder %s324, %s322
                  %s329 = sphi 0, %s398
                  %s330 = sphi %s279, %s401
                  %s331 = sphi %s292, %s402
                $region62: #{model_forward.1} parent=58 // loop_header_branch
                  %328 = sbr.rel (%p325) target = $region66
                $region63: #{model_forward.1} parent=58 // loop_body
                  %v332 = vld [vmem:[%s330] sm:$0xff]
                  %333 = vst [vmem:[%s331] sm:$0xff] %v332
                  %v334 = vld [vmem:[%s330 + $0x8] sm:$0xff]
                  %335 = vst [vmem:[%s331 + $0x8] sm:$0xff] %v334
                  %v336 = vld [vmem:[%s330 + $0x10] sm:$0xff]
                  %337 = vst [vmem:[%s331 + $0x10] sm:$0xff] %v336
                  %v338 = vld [vmem:[%s330 + $0x18] sm:$0xff]
                  %339 = vst [vmem:[%s331 + $0x18] sm:$0xff] %v338
                  %v340 = vld [vmem:[%s330 + $0x20] sm:$0xff]
                  %341 = vst [vmem:[%s331 + $0x20] sm:$0xff] %v340
                  %v342 = vld [vmem:[%s330 + $0x28] sm:$0xff]
                  %343 = vst [vmem:[%s331 + $0x28] sm:$0xff] %v342
                  %v344 = vld [vmem:[%s330 + $0x30] sm:$0xff]
                  %345 = vst [vmem:[%s331 + $0x30] sm:$0xff] %v344
                  %v346 = vld [vmem:[%s330 + $0x38] sm:$0xff]
                  %347 = vst [vmem:[%s331 + $0x38] sm:$0xff] %v346
                  %v348 = vld [vmem:[%s330 + $0x40] sm:$0xff]
                  %349 = vst [vmem:[%s331 + $0x40] sm:$0xff] %v348
                  %v350 = vld [vmem:[%s330 + $0x48] sm:$0xff]
                  %351 = vst [vmem:[%s331 + $0x48] sm:$0xff] %v350
                  %v352 = vld [vmem:[%s330 + $0x50] sm:$0xff]
                  %353 = vst [vmem:[%s331 + $0x50] sm:$0xff] %v352
                  %v354 = vld [vmem:[%s330 + $0x58] sm:$0xff]
                  %355 = vst [vmem:[%s331 + $0x58] sm:$0xff] %v354
                  %v356 = vld [vmem:[%s330 + $0x60] sm:$0xff]
                  %357 = vst [vmem:[%s331 + $0x60] sm:$0xff] %v356
                  %v358 = vld [vmem:[%s330 + $0x68] sm:$0xff]
                  %359 = vst [vmem:[%s331 + $0x68] sm:$0xff] %v358
                  %v360 = vld [vmem:[%s330 + $0x70] sm:$0xff]
                  %361 = vst [vmem:[%s331 + $0x70] sm:$0xff] %v360
                  %v362 = vld [vmem:[%s330 + $0x78] sm:$0xff]
                  %363 = vst [vmem:[%s331 + $0x78] sm:$0xff] %v362
                  %v364 = vld [vmem:[%s330 + $0x80] sm:$0xff]
                  %365 = vst [vmem:[%s331 + $0x80] sm:$0xff] %v364
                  %v366 = vld [vmem:[%s330 + $0x88] sm:$0xff]
                  %367 = vst [vmem:[%s331 + $0x88] sm:$0xff] %v366
                  %v368 = vld [vmem:[%s330 + $0x90] sm:$0xff]
                  %369 = vst [vmem:[%s331 + $0x90] sm:$0xff] %v368
                  %v370 = vld [vmem:[%s330 + $0x98] sm:$0xff]
                  %371 = vst [vmem:[%s331 + $0x98] sm:$0xff] %v370
                  %v372 = vld [vmem:[%s330 + $0xa0] sm:$0xff]
                  %373 = vst [vmem:[%s331 + $0xa0] sm:$0xff] %v372
                  %v374 = vld [vmem:[%s330 + $0xa8] sm:$0xff]
                  %375 = vst [vmem:[%s331 + $0xa8] sm:$0xff] %v374
                  %v376 = vld [vmem:[%s330 + $0xb0] sm:$0xff]
                  %377 = vst [vmem:[%s331 + $0xb0] sm:$0xff] %v376
                  %v378 = vld [vmem:[%s330 + $0xb8] sm:$0xff]
                  %379 = vst [vmem:[%s331 + $0xb8] sm:$0xff] %v378
                  %v380 = vld [vmem:[%s330 + $0xc0] sm:$0xff]
                  %381 = vst [vmem:[%s331 + $0xc0] sm:$0xff] %v380
                  %v382 = vld [vmem:[%s330 + $0xc8] sm:$0xff]
                  %383 = vst [vmem:[%s331 + $0xc8] sm:$0xff] %v382
                  %v384 = vld [vmem:[%s330 + $0xd0] sm:$0xff]
                  %385 = vst [vmem:[%s331 + $0xd0] sm:$0xff] %v384
                  %v386 = vld [vmem:[%s330 + $0xd8] sm:$0xff]
                  %387 = vst [vmem:[%s331 + $0xd8] sm:$0xff] %v386
                  %v388 = vld [vmem:[%s330 + $0xe0] sm:$0xff]
                  %389 = vst [vmem:[%s331 + $0xe0] sm:$0xff] %v388
                  %v390 = vld [vmem:[%s330 + $0xe8] sm:$0xff]
                  %391 = vst [vmem:[%s331 + $0xe8] sm:$0xff] %v390
                  %v392 = vld [vmem:[%s330 + $0xf0] sm:$0xff]
                  %393 = vst [vmem:[%s331 + $0xf0] sm:$0xff] %v392
                  %v394 = vld [vmem:[%s330 + $0xf8] sm:$0xff]
                  %395 = vst [vmem:[%s331 + $0xf8] sm:$0xff] %v394
                  %s396 = sadd.s32 1, %s329
                  %p397 = scmp.ge.s32.totalorder %s396, %s322
                  %s398 = scalar_select %p397, 0, %s396
                  %s399 = smul.u32 %s398, 256
                  %s400 = smul.u32 %s398, 256
                  %s401 = scalar_lea.vmem %s279, %s399 [#allocation2]
                  %s402 = scalar_lea.vmem %s292, %s400
                $region64: #{model_forward.1} parent=58 // loop_footer
                  %s326 = sadd.s32 %s324, 1
                $region65: #{model_forward.1} parent=58 // loop_footer_branch
                  %323 = sbr.rel target = $region61
                $region66: #{model_forward.1} parent=58 // loop_exit
                  _
                %s403 = sshrl.u32 %s321, 5
                %s404 = sand.u32 %s321, 31
                %s405 = smul.u32 %s403, 32
                %s406 = smul.u32 8, %s405
                %s407 = scalar_lea.vmem %s279, %s406 [#allocation2]
                %s408 = smul.u32 8, %s405
                %s409 = scalar_lea.vmem %s292, %s408
                // While loop
                $region67: #{model_forward.1} parent=58 // loop_pre_header
                  _
                $region68: #{model_forward.1} parent=58 // loop_header
                  %s411 = sphi 0, %s413
                  %p412 = scmp.ge.s32.totalorder %s411, %s404
                  %s416 = sphi 0, %s423
                  %s417 = sphi %s407, %s426
                  %s418 = sphi %s409, %s427
                $region69: #{model_forward.1} parent=58 // loop_header_branch
                  %415 = sbr.rel (%p412) target = $region73
                $region70: #{model_forward.1} parent=58 // loop_body
                  %v419 = vld [vmem:[%s417] sm:$0xff]
                  %420 = vst [vmem:[%s418] sm:$0xff] %v419
                  %s421 = sadd.s32 1, %s416
                  %p422 = scmp.ge.s32.totalorder %s421, %s404
                  %s423 = scalar_select %p422, 0, %s421
                  %s424 = smul.u32 %s423, 8
                  %s425 = smul.u32 %s423, 8
                  %s426 = scalar_lea.vmem %s407, %s424 [#allocation2]
                  %s427 = scalar_lea.vmem %s409, %s425
                $region71: #{model_forward.1} parent=58 // loop_footer
                  %s413 = sadd.s32 %s411, 1
                $region72: #{model_forward.1} parent=58 // loop_footer_branch
                  %410 = sbr.rel target = $region68
                $region73: #{model_forward.1} parent=58 // loop_exit
                  _
              $region59: #{model_forward.1} parent=43 // pred_fallthru
                _
              %p428 = pneg %p317
              // Predicated region
              $region74: #{model_forward.1} parent=43 // pred_check
                _
              $region75: #{model_forward.1} parent=43 // pred_check_branch
                %430 = sbr.rel (%p317) target = $region77
              $region76: #{model_forward.1} parent=43 // pred_region
                %s431 = sand.u32 %s293, 7
                %s432 = ssub.s32 %s293, %s431
                %s433 = scalar_lea.vmem %s279, %s432 [#allocation2]
                %s434 = ssub.s32 %s293, %s431
                %s435 = scalar_lea.vmem %s292, %s434
                %s436 = sshrl.u32 %s293, 3
                %s437 = sshrl.u32 %s436, 5
                // While loop
                $region78: #{model_forward.1} parent=76 // loop_pre_header
                  _
                $region79: #{model_forward.1} parent=76 // loop_header
                  %s439 = sphi 0, %s441
                  %p440 = scmp.ge.s32.totalorder %s439, %s437
                  %s444 = sphi 0, %s513
                  %s445 = sphi %s279, %s516
                  %s446 = sphi %s292, %s517
                $region80: #{model_forward.1} parent=76 // loop_header_branch
                  %443 = sbr.rel (%p440) target = $region84
                $region81: #{model_forward.1} parent=76 // loop_body
                  %v447 = vld [vmem:[%s445] sm:$0xff]
                  %448 = vst [vmem:[%s446] sm:$0xff] %v447
                  %v449 = vld [vmem:[%s445 + $0x8] sm:$0xff]
                  %450 = vst [vmem:[%s446 + $0x8] sm:$0xff] %v449
                  %v451 = vld [vmem:[%s445 + $0x10] sm:$0xff]
                  %452 = vst [vmem:[%s446 + $0x10] sm:$0xff] %v451
                  %v453 = vld [vmem:[%s445 + $0x18] sm:$0xff]
                  %454 = vst [vmem:[%s446 + $0x18] sm:$0xff] %v453
                  %v455 = vld [vmem:[%s445 + $0x20] sm:$0xff]
                  %456 = vst [vmem:[%s446 + $0x20] sm:$0xff] %v455
                  %v457 = vld [vmem:[%s445 + $0x28] sm:$0xff]
                  %458 = vst [vmem:[%s446 + $0x28] sm:$0xff] %v457
                  %v459 = vld [vmem:[%s445 + $0x30] sm:$0xff]
                  %460 = vst [vmem:[%s446 + $0x30] sm:$0xff] %v459
                  %v461 = vld [vmem:[%s445 + $0x38] sm:$0xff]
                  %462 = vst [vmem:[%s446 + $0x38] sm:$0xff] %v461
                  %v463 = vld [vmem:[%s445 + $0x40] sm:$0xff]
                  %464 = vst [vmem:[%s446 + $0x40] sm:$0xff] %v463
                  %v465 = vld [vmem:[%s445 + $0x48] sm:$0xff]
                  %466 = vst [vmem:[%s446 + $0x48] sm:$0xff] %v465
                  %v467 = vld [vmem:[%s445 + $0x50] sm:$0xff]
                  %468 = vst [vmem:[%s446 + $0x50] sm:$0xff] %v467
                  %v469 = vld [vmem:[%s445 + $0x58] sm:$0xff]
                  %470 = vst [vmem:[%s446 + $0x58] sm:$0xff] %v469
                  %v471 = vld [vmem:[%s445 + $0x60] sm:$0xff]
                  %472 = vst [vmem:[%s446 + $0x60] sm:$0xff] %v471
                  %v473 = vld [vmem:[%s445 + $0x68] sm:$0xff]
                  %474 = vst [vmem:[%s446 + $0x68] sm:$0xff] %v473
                  %v475 = vld [vmem:[%s445 + $0x70] sm:$0xff]
                  %476 = vst [vmem:[%s446 + $0x70] sm:$0xff] %v475
                  %v477 = vld [vmem:[%s445 + $0x78] sm:$0xff]
                  %478 = vst [vmem:[%s446 + $0x78] sm:$0xff] %v477
                  %v479 = vld [vmem:[%s445 + $0x80] sm:$0xff]
                  %480 = vst [vmem:[%s446 + $0x80] sm:$0xff] %v479
                  %v481 = vld [vmem:[%s445 + $0x88] sm:$0xff]
                  %482 = vst [vmem:[%s446 + $0x88] sm:$0xff] %v481
                  %v483 = vld [vmem:[%s445 + $0x90] sm:$0xff]
                  %484 = vst [vmem:[%s446 + $0x90] sm:$0xff] %v483
                  %v485 = vld [vmem:[%s445 + $0x98] sm:$0xff]
                  %486 = vst [vmem:[%s446 + $0x98] sm:$0xff] %v485
                  %v487 = vld [vmem:[%s445 + $0xa0] sm:$0xff]
                  %488 = vst [vmem:[%s446 + $0xa0] sm:$0xff] %v487
                  %v489 = vld [vmem:[%s445 + $0xa8] sm:$0xff]
                  %490 = vst [vmem:[%s446 + $0xa8] sm:$0xff] %v489
                  %v491 = vld [vmem:[%s445 + $0xb0] sm:$0xff]
                  %492 = vst [vmem:[%s446 + $0xb0] sm:$0xff] %v491
                  %v493 = vld [vmem:[%s445 + $0xb8] sm:$0xff]
                  %494 = vst [vmem:[%s446 + $0xb8] sm:$0xff] %v493
                  %v495 = vld [vmem:[%s445 + $0xc0] sm:$0xff]
                  %496 = vst [vmem:[%s446 + $0xc0] sm:$0xff] %v495
                  %v497 = vld [vmem:[%s445 + $0xc8] sm:$0xff]
                  %498 = vst [vmem:[%s446 + $0xc8] sm:$0xff] %v497
                  %v499 = vld [vmem:[%s445 + $0xd0] sm:$0xff]
                  %500 = vst [vmem:[%s446 + $0xd0] sm:$0xff] %v499
                  %v501 = vld [vmem:[%s445 + $0xd8] sm:$0xff]
                  %502 = vst [vmem:[%s446 + $0xd8] sm:$0xff] %v501
                  %v503 = vld [vmem:[%s445 + $0xe0] sm:$0xff]
                  %504 = vst [vmem:[%s446 + $0xe0] sm:$0xff] %v503
                  %v505 = vld [vmem:[%s445 + $0xe8] sm:$0xff]
                  %506 = vst [vmem:[%s446 + $0xe8] sm:$0xff] %v505
                  %v507 = vld [vmem:[%s445 + $0xf0] sm:$0xff]
                  %508 = vst [vmem:[%s446 + $0xf0] sm:$0xff] %v507
                  %v509 = vld [vmem:[%s445 + $0xf8] sm:$0xff]
                  %510 = vst [vmem:[%s446 + $0xf8] sm:$0xff] %v509
                  %s511 = sadd.s32 1, %s444
                  %p512 = scmp.ge.s32.totalorder %s511, %s437
                  %s513 = scalar_select %p512, 0, %s511
                  %s514 = smul.u32 %s513, 256
                  %s515 = smul.u32 %s513, 256
                  %s516 = scalar_lea.vmem %s279, %s514 [#allocation2]
                  %s517 = scalar_lea.vmem %s292, %s515
                $region82: #{model_forward.1} parent=76 // loop_footer
                  %s441 = sadd.s32 %s439, 1
                $region83: #{model_forward.1} parent=76 // loop_footer_branch
                  %438 = sbr.rel target = $region79
                $region84: #{model_forward.1} parent=76 // loop_exit
                  _
                %s518 = sshrl.u32 %s436, 5
                %s519 = sand.u32 %s436, 31
                %s520 = smul.u32 %s518, 32
                %s521 = smul.u32 8, %s520
                %s522 = scalar_lea.vmem %s279, %s521 [#allocation2]
                %s523 = smul.u32 8, %s520
                %s524 = scalar_lea.vmem %s292, %s523
                // While loop
                $region85: #{model_forward.1} parent=76 // loop_pre_header
                  _
                $region86: #{model_forward.1} parent=76 // loop_header
                  %s526 = sphi 0, %s528
                  %p527 = scmp.ge.s32.totalorder %s526, %s519
                  %s531 = sphi 0, %s538
                  %s532 = sphi %s522, %s541
                  %s533 = sphi %s524, %s542
                $region87: #{model_forward.1} parent=76 // loop_header_branch
                  %530 = sbr.rel (%p527) target = $region91
                $region88: #{model_forward.1} parent=76 // loop_body
                  %v534 = vld [vmem:[%s532] sm:$0xff]
                  %535 = vst [vmem:[%s533] sm:$0xff] %v534
                  %s536 = sadd.s32 1, %s531
                  %p537 = scmp.ge.s32.totalorder %s536, %s519
                  %s538 = scalar_select %p537, 0, %s536
                  %s539 = smul.u32 %s538, 8
                  %s540 = smul.u32 %s538, 8
                  %s541 = scalar_lea.vmem %s522, %s539 [#allocation2]
                  %s542 = scalar_lea.vmem %s524, %s540
                $region89: #{model_forward.1} parent=76 // loop_footer
                  %s528 = sadd.s32 %s526, 1
                $region90: #{model_forward.1} parent=76 // loop_footer_branch
                  %525 = sbr.rel target = $region86
                $region91: #{model_forward.1} parent=76 // loop_exit
                  _
                %s543 = sshll.u32 1, %s431
                %s544 = ssub.s32 %s543, 1
                loop: start=0, step=1, limit=1
                $region92: #{model_forward.1} parent=76 // loop_pre_header
                  _
                $region93: #{model_forward.1} parent=76 // loop_header
                  %s546 = sphi 0, %s550
                  %p547 = scmp.ge.s32.totalorder %s546, 1
                  %s551 = sphi %s433, %s433
                  %s552 = sphi %s435, %s435
                $region94: #{model_forward.1} parent=76 // loop_header_branch
                  %549 = sbr.rel (%p547) target = $region98
                $region95: #{model_forward.1} parent=76 // loop_body
                  %v553 = vld [vmem:[%s551] sm:%s544]
                  %554 = vst [vmem:[%s552] sm:%s544] %v553
                $region96: #{model_forward.1} parent=76 // loop_footer
                  %s550 = sadd.s32 1, %s546
                $region97: #{model_forward.1} parent=76 // loop_footer_branch
                  %545 = sbr.rel target = $region93
                $region98: #{model_forward.1} parent=76 // loop_exit
                  _
              $region77: #{model_forward.1} parent=43 // pred_fallthru
                _
            $region44: #{model_forward.1} parent=39 // pred_fallthru
              _
            // Predicated region
            $region45: #{model_forward.1} parent=39 // pred_check
              %p301 = pneg %p297
            $region46: #{model_forward.1} parent=39 // pred_check_branch
              %303 = sbr.rel (%p301) target = $region48
            $region47: #{model_forward.1} parent=39 // pred_region
              %s304 = sshll.u32 1, %s293
              %s305 = ssub.s32 %s304, 1
              loop: start=0, step=1, limit=1
              $region49: #{model_forward.1} parent=47 // loop_pre_header
                _
              $region50: #{model_forward.1} parent=47 // loop_header
                %s307 = sphi 0, %s311
                %p308 = scmp.ge.s32.totalorder %s307, 1
                %s312 = sphi %s279, %s279
                %s313 = sphi %s292, %s292
              $region51: #{model_forward.1} parent=47 // loop_header_branch
                %310 = sbr.rel (%p308) target = $region55
              $region52: #{model_forward.1} parent=47 // loop_body
                %v314 = vld [vmem:[%s312] sm:%s305]
                %315 = vst [vmem:[%s313] sm:%s305] %v314
              $region53: #{model_forward.1} parent=47 // loop_footer
                %s311 = sadd.s32 1, %s307
              $region54: #{model_forward.1} parent=47 // loop_footer_branch
                %306 = sbr.rel target = $region50
              $region55: #{model_forward.1} parent=47 // loop_exit
                _
            $region48: #{model_forward.1} parent=39 // pred_fallthru
              _
          $region40: #{model_forward.1} parent=35 // pred_fallthru
            _
          %555 = vnop
        $region36: #{model_forward.1} parent=31 // pred_fallthru
          _
      $region32: #{model_forward.1} parent=5 // pred_fallthru
        _
      %p556 = scmp.le.s32.totalorder 2, %s9
      // Predicated region
      $region99: #{model_forward.1} parent=5 // pred_check
        %p557 = pneg %p556
      $region100: #{model_forward.1} parent=5 // pred_check_branch
        %559 = sbr.rel (%p557) target = $region102
      $region101: #{model_forward.1} parent=5 // pred_region
        %s560 = ssub.s32 %s9, 2
        // Predicated region
        $region103: #{model_forward.1} parent=101 // pred_check
          %p561 = pneg %p122
        $region104: #{model_forward.1} parent=101 // pred_check_branch
          %563 = sbr.rel (%p561) target = $region106
        $region105: #{model_forward.1} parent=101 // pred_region
          %s564 = sand.u32 %s107, 1
          %s565 = sand.u32 %s107, 1
          %s566 = smul.addr %s565, 16
          %s567 = scalar_lea.vmem [#allocation2], %s566
        $region106: #{model_forward.1} parent=101 // pred_fallthru
          _
      $region102: #{model_forward.1} parent=5 // pred_fallthru
        _
    $region6: #{model_forward.1} parent=1 // loop_footer
      %s13 = sadd.s32 1, %s9
    $region7: #{model_forward.1} parent=1 // loop_footer_branch
      %8 = sbr.rel target = $region3
    $region8: #{model_forward.1} parent=1 // loop_exit
      _

</llo_original>
